<compile_context>
chip_gen: v7x
topology: tpu7x:2x2x1
jax: 0.10.0
libtpu: 0.0.40
codegen_flags: <defaults>
</compile_context>

<pallas_src>
import functools

import jax
import jax.numpy as jnp
from jax import lax
from jax.experimental import pallas as pl
from jax.experimental.pallas import tpu as pltpu


def _head_kernel(xl_ref, xr_ref,
                 w1_ref, b1_ref,
                 w2_ref, b2_ref,
                 w3_ref, b3_ref,
                 o_ref):
    # Layer 1: [xl | xr] @ W1 (BN0/BN1 pre-folded into W1, b1), then ReLU.
    # Single K = L+R dot: concatenate the bf16 tiles along the lane axis
    # in-register instead of issuing two half-depth MXU pushes.
    xl = xl_ref[...].astype(jnp.bfloat16)
    xr = xr_ref[...].astype(jnp.bfloat16)
    x = jnp.concatenate([xl, xr], axis=-1)                     # (TB, L+R) bf16
    h = jnp.dot(x, w1_ref[...],
                preferred_element_type=jnp.float32) + b1_ref[...]
    h = jnp.maximum(h, 0.0)

    # Layer 2: BN2 pre-folded into (W2, b2), then ReLU.
    h = jnp.dot(h.astype(jnp.bfloat16), w2_ref[...],
                preferred_element_type=jnp.float32) + b2_ref[...]
    h = jnp.maximum(h, 0.0)

    # Logits as a lane-dense (1, TB) row: (1,128) x (TB,128)^T (trans_b dot).
    logits = lax.dot_general(
        w3_ref[...], h.astype(jnp.bfloat16),
        dimension_numbers=(((1,), (1,)), ((), ())),
        preferred_element_type=jnp.float32) + b3_ref[...]
    o_ref[...] = jax.nn.sigmoid(logits)


def _round_up(n, m):
    return (n + m - 1) // m * m


def _choose_tb(batch, block_b):
    """Pick a batch-row tile size.

    * Small batches: a single whole-array tile (any B is legal when the block
      dims equal the full array dims; no padding needed).
    * Large batches: a 128-multiple tile (lane-dense output stores), capped at
      block_b (VMEM) and sized so the grid has ~4+ steps (v7x two-core
      occupancy + pipeline overlap). Partial tail tiles are handled by Pallas
      boundary masking, so no HBM-side jnp.pad is required.
    """
    if batch <= 512:
        return batch
    block_b = max(128, _round_up(block_b, 128))
    tb = min(block_b, _round_up(pl.cdiv(batch, 4), 128))
    return max(tb, 128)


def _const_spec(arr):
    # Whole-array block, resident across the batch grid (constant index_map).
    ndim = arr.ndim
    return pl.BlockSpec(arr.shape, lambda i, _n=ndim: (0,) * _n)


@functools.partial(jax.jit, static_argnames=("block_b",))
def baseline_head_forward(x_left, x_right, params, *, block_b=2048):
    """params: dict from init_params(). Returns (B, 1) probabilities."""
    B, L = x_left.shape
    R = x_right.shape[1]
    eps = 1e-5

    def fold_bn(p):
        gamma, beta, mean, var = p
        scale = gamma / jnp.sqrt(var + eps)
        shift = beta - mean * scale
        return scale, shift

    s0, t0 = fold_bn(params["bn0"])
    s1, t1 = fold_bn(params["bn1"])
    s2, t2 = fold_bn(params["bn2"])

    # PyTorch Linear stores (out, in); transpose to (in, out) and fold the
    # surrounding inference-mode BatchNorm affines into the weights/biases.
    w1 = params["w1"].T * s0[:, None] * s1[None, :]            # (L+R, 256)
    b1 = (t0 @ params["w1"].T + params["b1"]) * s1 + t1        # (256,)
    w2 = params["w2"].T * s2[None, :]                          # (256, 128)
    b2 = params["b2"] * s2 + t2                                # (128,)
    w3 = params["w3"]                                          # (1, 128) row
    b3 = params["b3"]                                          # (1,)

    # bf16 MXU operands (f32 accumulation inside the kernel).
    w1b = w1.astype(jnp.bfloat16)                              # (L+R, 256)
    w2b = w2.astype(jnp.bfloat16)                              # (256, 128)
    w3b = w3.astype(jnp.bfloat16)                              # (1, 128)
    b1 = b1.reshape(1, -1).astype(jnp.float32)
    b2 = b2.reshape(1, -1).astype(jnp.float32)
    b3 = b3.reshape(1, 1).astype(jnp.float32)

    TB = _choose_tb(B, block_b)
    grid = (pl.cdiv(B, TB),)

    out = pl.pallas_call(
        _head_kernel,
        out_shape=jax.ShapeDtypeStruct((1, B), jnp.float32),
        grid=grid,
        in_specs=[
            pl.BlockSpec((TB, L), lambda i: (i, 0)),
            pl.BlockSpec((TB, R), lambda i: (i, 0)),
            _const_spec(w1b), _const_spec(b1),
            _const_spec(w2b), _const_spec(b2),
            _const_spec(w3b), _const_spec(b3),
        ],
        out_specs=pl.BlockSpec((1, TB), lambda i: (0, i)),
        compiler_params=pltpu.CompilerParams(
            dimension_semantics=("parallel",),
            # TB <= 2048 fits the 16 MiB v5e scoped-VMEM default; larger tiles
            # get an explicit (still safe on v5e/v6e/v7x) 32 MiB cap.
            vmem_limit_bytes=(32 * 1024 * 1024 if TB > 2048 else None)),
    )(x_left, x_right, w1b, b1, w2b, b2, w3b, b3)

    return out.reshape(B, 1)


def init_params(key, input_size):
    """Deterministic synthetic parameters matching the PyTorch module shapes."""
    ks = jax.random.split(key, 20)

    def lin(kw, kb, fan_in, fan_out):
        bound = 1.0 / jnp.sqrt(fan_in)
        w = jax.random.uniform(kw, (fan_out, fan_in), jnp.float32, -bound, bound)
        b = jax.random.uniform(kb, (fan_out,), jnp.float32, -bound, bound)
        return w, b

    def bn(kg, kb, km, kv, n):
        gamma = 1.0 + 0.1 * jax.random.normal(kg, (n,), jnp.float32)
        beta = 0.1 * jax.random.normal(kb, (n,), jnp.float32)
        mean = 0.1 * jax.random.normal(km, (n,), jnp.float32)
        var = 1.0 + 0.1 * jax.random.uniform(kv, (n,), jnp.float32)
        return (gamma, beta, mean, var)

    w1, b1 = lin(ks[0], ks[1], input_size, 256)
    w2, b2 = lin(ks[2], ks[3], 256, 128)
    w3, b3 = lin(ks[4], ks[5], 128, 1)
    return {
        "bn0": bn(ks[6], ks[7], ks[8], ks[9], input_size),
        "w1": w1, "b1": b1,
        "bn1": bn(ks[10], ks[11], ks[12], ks[13], 256),
        "w2": w2, "b2": b2,
        "bn2": bn(ks[14], ks[15], ks[16], ks[17], 128),
        "w3": w3, "b3": b3,
    }


def _reference(x_left, x_right, params):
    """Pure-JAX (f32) reference of the same inference-mode forward pass."""
    x = jnp.concatenate([x_left, x_right], axis=1).astype(jnp.float32)
    eps = 1e-5

    def bn(h, p):
        gamma, beta, mean, var = p
        return (h - mean) / jnp.sqrt(var + eps) * gamma + beta

    h = bn(x, params["bn0"])
    h = h @ params["w1"].T + params["b1"]
    h = jnp.maximum(bn(h, params["bn1"]), 0.0)
    h = h @ params["w2"].T + params["b2"]
    h = jnp.maximum(bn(h, params["bn2"]), 0.0)
    logits = h @ params["w3"].T + params["b3"]
    return jax.nn.sigmoid(logits)


if __name__ == "__main__":
    left_size, right_size = 16, 16
    input_size = left_size + right_size

    key = jax.random.PRNGKey(0)
    k_left, k_right, k_params = jax.random.split(key, 3)
    params = init_params(k_params, input_size)

    # Small batch: single whole-array tile path.
    batch = 8
    x_left = jax.random.normal(k_left, (batch, left_size), jnp.float32)
    x_right = jax.random.normal(k_right, (batch, right_size), jnp.float32)
    out = jax.block_until_ready(baseline_head_forward(x_left, x_right, params))
    ref = _reference(x_left, x_right, params)
    assert out.shape == (batch, 1)
    # bf16 MXU operands with f32 accumulation -> loosen tolerance slightly.
    assert jnp.allclose(out, ref, atol=2e-2), (
        f"small-batch mismatch: max abs diff {jnp.max(jnp.abs(out - ref))}")

    # Larger batch: multi-tile grid with a partial (boundary-masked) tail tile.
    batch2 = 1000
    x_left2 = jax.random.normal(k_left, (batch2, left_size), jnp.float32)
    x_right2 = jax.random.normal(k_right, (batch2, right_size), jnp.float32)
    out2 = jax.block_until_ready(baseline_head_forward(x_left2, x_right2, params))
    ref2 = _reference(x_left2, x_right2, params)
    assert out2.shape == (batch2, 1)
    assert jnp.allclose(out2, ref2, atol=2e-2), (
        f"large-batch mismatch: max abs diff {jnp.max(jnp.abs(out2 - ref2))}")

    print("KERNEL_OK")
</pallas_src>

<mosaic_0001>
module attributes {stable_mosaic.version = 11 : i64} {
  func.func @_head_kernel(%arg0: i32, %arg1: memref<8x16xf32, #tpu.memory_space<vmem>>, %arg2: memref<8x16xf32, #tpu.memory_space<vmem>>, %arg3: memref<32x256xbf16, #tpu.memory_space<vmem>>, %arg4: memref<1x256xf32, #tpu.memory_space<vmem>>, %arg5: memref<256x128xbf16, #tpu.memory_space<vmem>>, %arg6: memref<1x128xf32, #tpu.memory_space<vmem>>, %arg7: memref<1x128xbf16, #tpu.memory_space<vmem>>, %arg8: memref<1x1xf32, #tpu.memory_space<vmem>>, %arg9: memref<1x8xf32, #tpu.memory_space<vmem>>) attributes {dimension_semantics = [#tpu.dimension_semantics<parallel>], iteration_bounds = array<i64: 1>, scalar_prefetch = 0 : i64, scratch_operands = 0 : i64, tpu.core_type = #tpu.core_type<tc>, window_params = [{transform_indices = @transform_0, window_bounds = array<i64: 8, 16>}, {transform_indices = @transform_1, window_bounds = array<i64: 8, 16>}, {pipeline_mode = #tpu.pipeline_mode<synchronous>, transform_indices = @transform_2, window_bounds = array<i64: 32, 256>}, {pipeline_mode = #tpu.pipeline_mode<synchronous>, transform_indices = @transform_3, window_bounds = array<i64: 1, 256>}, {pipeline_mode = #tpu.pipeline_mode<synchronous>, transform_indices = @transform_4, window_bounds = array<i64: 256, 128>}, {pipeline_mode = #tpu.pipeline_mode<synchronous>, transform_indices = @transform_5, window_bounds = array<i64: 1, 128>}, {pipeline_mode = #tpu.pipeline_mode<synchronous>, transform_indices = @transform_6, window_bounds = array<i64: 1, 128>}, {pipeline_mode = #tpu.pipeline_mode<synchronous>, transform_indices = @transform_7, window_bounds = array<i64: 1, 1>}, {transform_indices = @transform_8, window_bounds = array<i64: 1, 8>}]} {
    %c0 = arith.constant 0 : index
    %c0_0 = arith.constant 0 : index
    %0 = vector.load %arg1[%c0, %c0_0] : memref<8x16xf32, #tpu.memory_space<vmem>>, vector<8x16xf32>
    %1 = arith.truncf %0 : vector<8x16xf32> to vector<8x16xbf16>
    %c0_1 = arith.constant 0 : index
    %c0_2 = arith.constant 0 : index
    %2 = vector.load %arg2[%c0_1, %c0_2] : memref<8x16xf32, #tpu.memory_space<vmem>>, vector<8x16xf32>
    %3 = arith.truncf %2 : vector<8x16xf32> to vector<8x16xbf16>
    %4 = tpu.concatenate %1, %3 in 1 : vector<8x16xbf16>, vector<8x16xbf16> -> vector<8x32xbf16>
    %c0_3 = arith.constant 0 : index
    %c0_4 = arith.constant 0 : index
    %5 = vector.load %arg3[%c0_3, %c0_4] : memref<32x256xbf16, #tpu.memory_space<vmem>>, vector<32x256xbf16>
    %cst = arith.constant dense<0.000000e+00> : vector<8x256xf32>
    %6 = tpu.matmul %4, %5, %cst {dimension_numbers = #tpu.dot_dimension_numbers<[1], [0], [0], [1], [0, 0, 1, 1], [], []>} : vector<8x32xbf16>, vector<32x256xbf16>, vector<8x256xf32> -> vector<8x256xf32>
    %c0_5 = arith.constant 0 : index
    %c0_6 = arith.constant 0 : index
    %7 = vector.load %arg4[%c0_5, %c0_6] : memref<1x256xf32, #tpu.memory_space<vmem>>, vector<1x256xf32>
    %8 = vector.broadcast %7 : vector<1x256xf32> to vector<8x256xf32>
    %9 = arith.addf %6, %8 : vector<8x256xf32>
    %cst_7 = arith.constant 0.000000e+00 : f32
    %10 = vector.broadcast %cst_7 : f32 to vector<8x256xf32>
    %11 = arith.maximumf %9, %10 : vector<8x256xf32>
    %12 = arith.truncf %11 : vector<8x256xf32> to vector<8x256xbf16>
    %c0_8 = arith.constant 0 : index
    %c0_9 = arith.constant 0 : index
    %13 = vector.load %arg5[%c0_8, %c0_9] : memref<256x128xbf16, #tpu.memory_space<vmem>>, vector<256x128xbf16>
    %cst_10 = arith.constant dense<0.000000e+00> : vector<8x128xf32>
    %14 = tpu.matmul %12, %13, %cst_10 {dimension_numbers = #tpu.dot_dimension_numbers<[1], [0], [0], [1], [0, 0, 1, 1], [], []>} : vector<8x256xbf16>, vector<256x128xbf16>, vector<8x128xf32> -> vector<8x128xf32>
    %c0_11 = arith.constant 0 : index
    %c0_12 = arith.constant 0 : index
    %15 = vector.load %arg6[%c0_11, %c0_12] : memref<1x128xf32, #tpu.memory_space<vmem>>, vector<1x128xf32>
    %16 = vector.broadcast %15 : vector<1x128xf32> to vector<8x128xf32>
    %17 = arith.addf %14, %16 : vector<8x128xf32>
    %cst_13 = arith.constant 0.000000e+00 : f32
    %18 = vector.broadcast %cst_13 : f32 to vector<8x128xf32>
    %19 = arith.maximumf %17, %18 : vector<8x128xf32>
    %c0_14 = arith.constant 0 : index
    %c0_15 = arith.constant 0 : index
    %20 = vector.load %arg7[%c0_14, %c0_15] : memref<1x128xbf16, #tpu.memory_space<vmem>>, vector<1x128xbf16>
    %21 = arith.truncf %19 : vector<8x128xf32> to vector<8x128xbf16>
    %cst_16 = arith.constant dense<0.000000e+00> : vector<1x8xf32>
    %22 = tpu.matmul %20, %21, %cst_16 {dimension_numbers = #tpu.dot_dimension_numbers<[1], [1], [0], [0], [0, 0, 1, 0], [], []>} : vector<1x128xbf16>, vector<8x128xbf16>, vector<1x8xf32> -> vector<1x8xf32>
    %c0_17 = arith.constant 0 : index
    %c0_18 = arith.constant 0 : index
    %23 = vector.load %arg8[%c0_17, %c0_18] : memref<1x1xf32, #tpu.memory_space<vmem>>, vector<1x1xf32>
    %24 = vector.broadcast %23 : vector<1x1xf32> to vector<1x8xf32>
    %25 = arith.addf %22, %24 : vector<1x8xf32>
    %26 = arith.negf %25 : vector<1x8xf32>
    %27 = math.exp %26 : vector<1x8xf32>
    %cst_19 = arith.constant 1.000000e+00 : f32
    %28 = vector.broadcast %cst_19 : f32 to vector<1x8xf32>
    %29 = arith.addf %28, %27 : vector<1x8xf32>
    %30 = arith.divf %28, %29 : vector<1x8xf32>
    %c0_20 = arith.constant 0 : index
    %c0_21 = arith.constant 0 : index
    %31 = vector.load %arg9[%c0_20, %c0_21] : memref<1x8xf32, #tpu.memory_space<vmem>>, vector<1x8xf32>
    tpu.vector_store %arg9[%c0_20, %c0_21], %30 {strides = array<i32>} : memref<1x8xf32, #tpu.memory_space<vmem>>, vector<1x8xf32>,
    return
  }
  func.func @transform_0(%arg0: i32) -> (i32, i32) {
    %c0_i32 = arith.constant 0 : i32
    %c0_i32_0 = arith.constant 0 : i32
    return %arg0, %c0_i32 : i32, i32
  }
  func.func @transform_1(%arg0: i32) -> (i32, i32) {
    %c0_i32 = arith.constant 0 : i32
    %c0_i32_0 = arith.constant 0 : i32
    return %arg0, %c0_i32 : i32, i32
  }
  func.func @transform_2(%arg0: i32) -> (i32, i32) {
    %c0_i32 = arith.constant 0 : i32
    %c0_i32_0 = arith.constant 0 : i32
    %c0_i32_1 = arith.constant 0 : i32
    return %c0_i32, %c0_i32_0 : i32, i32
  }
  func.func @transform_3(%arg0: i32) -> (i32, i32) {
    %c0_i32 = arith.constant 0 : i32
    %c0_i32_0 = arith.constant 0 : i32
    %c0_i32_1 = arith.constant 0 : i32
    return %c0_i32, %c0_i32_0 : i32, i32
  }
  func.func @transform_4(%arg0: i32) -> (i32, i32) {
    %c0_i32 = arith.constant 0 : i32
    %c0_i32_0 = arith.constant 0 : i32
    %c0_i32_1 = arith.constant 0 : i32
    return %c0_i32, %c0_i32_0 : i32, i32
  }
  func.func @transform_5(%arg0: i32) -> (i32, i32) {
    %c0_i32 = arith.constant 0 : i32
    %c0_i32_0 = arith.constant 0 : i32
    %c0_i32_1 = arith.constant 0 : i32
    return %c0_i32, %c0_i32_0 : i32, i32
  }
  func.func @transform_6(%arg0: i32) -> (i32, i32) {
    %c0_i32 = arith.constant 0 : i32
    %c0_i32_0 = arith.constant 0 : i32
    %c0_i32_1 = arith.constant 0 : i32
    return %c0_i32, %c0_i32_0 : i32, i32
  }
  func.func @transform_7(%arg0: i32) -> (i32, i32) {
    %c0_i32 = arith.constant 0 : i32
    %c0_i32_0 = arith.constant 0 : i32
    %c0_i32_1 = arith.constant 0 : i32
    return %c0_i32, %c0_i32_0 : i32, i32
  }
  func.func @transform_8(%arg0: i32) -> (i32, i32) {
    %c0_i32 = arith.constant 0 : i32
    %c0_i32_0 = arith.constant 0 : i32
    return %c0_i32, %arg0 : i32, i32
  }
}

</mosaic_0001>

<llo_original>
// kernel: baseline_head_forward.1
$region0: #{baseline_head_forward.1}
  #allocation0 [shape = 'u32[]', space=smem, size = 0x4, offset = 0x4, fixed_abs, tag = 'smem constant byte address 0x4 - core index']
  #allocation1 [shape = 'u32[144,128]{1,0:T(1,128)}', space=vmem, size = 0x12000, scoped, tag = 'internal scratch']
  #allocation2 [shape = 'f32[1,1]{1,0:T(1,128)S(1)}', space=vmem, size = 0x200, scoped, tag = 'scoped memory for baseline_head_forward.1']
  %s0 = inlined_call_operand.vmem [shape: f32[8,16], index: 0, kind: input, shape index: {}]
  %s1 = inlined_call_operand.vmem [shape: f32[8,16], index: 1, kind: input, shape index: {}]
  %s2 = inlined_call_operand.vmem [shape: bf16[32,256], index: 2, kind: input, shape index: {}]
  %s3 = inlined_call_operand.vmem [shape: f32[1,256], index: 3, kind: input, shape index: {}]
  %s4 = inlined_call_operand.vmem [shape: bf16[256,128], index: 4, kind: input, shape index: {}]
  %s5 = inlined_call_operand.vmem [shape: f32[1,128], index: 5, kind: input, shape index: {}]
  %s6 = inlined_call_operand.vmem [shape: bf16[1,128], index: 6, kind: input, shape index: {}]
  %s7 = inlined_call_operand.<no memory space> [shape: f32[1,1], index: 7, kind: input, shape index: {}]
  %s8 = inlined_call_operand.hbm [shape: f32[1,8], index: 8, kind: output, shape index: {}]
  %s9 = sld [smem:[#allocation0]]
  $region42: #{baseline_head_forward.1} parent=0
    _
  %s11 = ssub.s32 1, %s9
  %s12 = scalar_select 0, %s11, %s9
  %v13 = vstv %s7
  %14 = vst [vmem:[#allocation2] sm:$0x1] %v13
  $region1: #{baseline_head_forward.1} parent=0
    #allocation3 [shape = 'u8[512]{0}', space=vmem, size = 0x400, scoped, tag = 'output window, operand 0, single buffered']
    #allocation4 [shape = 's32[1]{0}', space=sflag, size = 0x4, scoped, tag = 'scoped memory for baseline_head_forward.1']
    %15 = vsyncpa [#allocation4], 0
    // Predicated region
    $region2: #{baseline_head_forward.1} parent=1 // pred_check
      _
    $region3: #{baseline_head_forward.1} parent=1 // pred_check_branch
      %17 = sbr.rel (0) target = $region5
    $region4: #{baseline_head_forward.1} parent=1 // pred_region
      _
    $region5: #{baseline_head_forward.1} parent=1 // pred_fallthru
      _
    // Predicated region
    $region6: #{baseline_head_forward.1} parent=1 // pred_check
      _
    $region7: #{baseline_head_forward.1} parent=1 // pred_check_branch
      %19 = sbr.rel (0) target = $region9
    $region8: #{baseline_head_forward.1} parent=1 // pred_region
      _
    $region9: #{baseline_head_forward.1} parent=1 // pred_fallthru
      _
    // Predicated region
    $region10: #{baseline_head_forward.1} parent=1 // pred_check
      _
    $region11: #{baseline_head_forward.1} parent=1 // pred_check_branch
      %21 = sbr.rel (0) target = $region13
    $region12: #{baseline_head_forward.1} parent=1 // pred_region
      _
    $region13: #{baseline_head_forward.1} parent=1 // pred_fallthru
      _
    // Predicated region
    $region14: #{baseline_head_forward.1} parent=1 // pred_check
      _
    $region15: #{baseline_head_forward.1} parent=1 // pred_check_branch
      %23 = sbr.rel (0) target = $region17
    $region16: #{baseline_head_forward.1} parent=1 // pred_region
      _
    $region17: #{baseline_head_forward.1} parent=1 // pred_fallthru
      _
    // Predicated region
    $region18: #{baseline_head_forward.1} parent=1 // pred_check
      _
    $region19: #{baseline_head_forward.1} parent=1 // pred_check_branch
      %25 = sbr.rel (0) target = $region21
    $region20: #{baseline_head_forward.1} parent=1 // pred_region
      _
    $region21: #{baseline_head_forward.1} parent=1 // pred_fallthru
      _
    // Predicated region
    $region22: #{baseline_head_forward.1} parent=1 // pred_check
      _
    $region23: #{baseline_head_forward.1} parent=1 // pred_check_branch
      %27 = sbr.rel (0) target = $region25
    $region24: #{baseline_head_forward.1} parent=1 // pred_region
      _
    $region25: #{baseline_head_forward.1} parent=1 // pred_fallthru
      _
    // Predicated region
    $region26: #{baseline_head_forward.1} parent=1 // pred_check
      _
    $region27: #{baseline_head_forward.1} parent=1 // pred_check_branch
      %29 = sbr.rel (0) target = $region29
    $region28: #{baseline_head_forward.1} parent=1 // pred_region
      _
    $region29: #{baseline_head_forward.1} parent=1 // pred_fallthru
      _
    // Predicated region
    $region30: #{baseline_head_forward.1} parent=1 // pred_check
      _
    $region31: #{baseline_head_forward.1} parent=1 // pred_check_branch
      %31 = sbr.rel (0) target = $region33
    $region32: #{baseline_head_forward.1} parent=1 // pred_region
      _
    $region33: #{baseline_head_forward.1} parent=1 // pred_fallthru
      _
    %v33 = vld [vmem:[%s0] sm:$0xff]
    %v34 = vpack.c.bf16 %v33, %v33
    %v35 = vld [vmem:[%s1] sm:$0xff]
    %v36 = vpack.c.bf16 %v35, %v35
    %38 = vrot.lane.b32.xlu0 %v36, 16
    %v39 = vpop.permute.xlu0 %38
    %vm40 = vcmask 130048
    %v43 = vsel %vm40, %v34, %v39
    %v44 = vld [vmem:[%s2] sm:$0xff]
    %v45 = vld [vmem:[%s2 + $0x8] sm:$0xff]
    %v46 = vld [vmem:[%s2 + $0x10] sm:$0xff]
    %v47 = vld [vmem:[%s2 + $0x18] sm:$0xff]
    %v48 = vld [vmem:[%s3] sm:$0x3]
    %v50 = vlaneseq
    %v51 = vshrl.u32 %v50, 7
    %v52 = vsub.s32 0, %v51
    %v53 = vrot.slane %v48, %v52
    %v54 = vlaneseq
    %v55 = vshrl.u32 %v54, 7
    %v56 = vsub.s32 1, %v55
    %v57 = vrot.slane %v48, %v56
    %v64 = vunpack.c.l.b16 %v44
    %v65 = vunpack.c.h.b16 %v44
    %v66 = vunpack.c.l.b16 %v45
    %v67 = vunpack.c.h.b16 %v45
    %v68 = vunpack.c.l.b16 %v46
    %v69 = vunpack.c.h.b16 %v46
    %v70 = vunpack.c.l.b16 %v47
    %v71 = vunpack.c.h.b16 %v47
    %v72 = vpack.c.b16 %v66, %v64
    %v73 = vpack.c.b16 %v67, %v65
    %v74 = vpack.c.b16 %v70, %v68
    %v75 = vpack.c.b16 %v71, %v69
    %vm80 = vcmask 261120
    %v81 = vsel %vm80, %v43, 0
    %83 = vmatprep.subr.bf16.mxu0 %v73
    %84 = vmatpush1.bf16.msra.mxu0 %v72
    %85 = vmatprep.subr.bf16.mxu0 %v75
    %86 = vmatpush1.bf16.msra.mxu0 %v74
    %87 = vmatprep.subr.bf16.mxu0 0
    %88 = vmatpush1.bf16.msra.mxu0 0
    %89 = vmatprep.subr.bf16.mxu0 0
    %90 = vmatpush1.bf16.msra.mxu0 0
    %91 = vmatprep.subr.bf16.mxu0 0
    %92 = vmatpush1.bf16.msra.mxu0 0
    %93 = vmatprep.subr.bf16.mxu0 0
    %94 = vmatpush1.bf16.msra.mxu0 0
    %95 = vmatprep.subr.bf16.mxu0 0
    %96 = vmatpush1.bf16.msra.mxu0 0
    %97 = vmatprep.subr.bf16.mxu0 0
    %98 = vmatpush1.bf16.msra.mxu0 0
    %99 = vmatprep.subr.bf16.mxu0 0
    %100 = vmatpush1.bf16.msra.mxu0 0
    %101 = vmatprep.subr.bf16.mxu0 0
    %102 = vmatpush1.bf16.msra.mxu0 0
    %103 = vmatprep.subr.bf16.mxu0 0
    %104 = vmatpush1.bf16.msra.mxu0 0
    %105 = vmatprep.subr.bf16.mxu0 0
    %106 = vmatpush1.bf16.msra.mxu0 0
    %107 = vmatprep.subr.bf16.mxu0 0
    %108 = vmatpush1.bf16.msra.mxu0 0
    %109 = vmatprep.subr.bf16.mxu0 0
    %110 = vmatpush1.bf16.msra.mxu0 0
    %111 = vmatprep.subr.bf16.mxu0 0
    %112 = vmatpush1.bf16.msra.mxu0 0
    %113 = vmatprep.subr.bf16.mxu0 0
    %114 = vmatpush1.bf16.msra.mxu0 0
    %115 = vmatprep.mubr.bf16.mxu0 0
    %116 = vmatmul.mubr.bf16.gmra.mrb[0].mxu0 %v81
    %v117 = vpop.f32.mrb[0].mxu0
    %v118 = vadd.f32 %v53, %v117
    %v119 = vpop.f32.mrb[0].mxu0
    %v120 = vadd.f32 %v57, %v119
    %v121 = vpop.f32.mrb[0].mxu0
    %v122 = vpop.f32.mrb[0].mxu0
    %123 = vdwg.mxu0
    %v124 = vmax.f32 %v118, 0.0
    %v125 = vmax.f32 %v120, 0.0
    %v126 = vpack.c.bf16 %v124, %v124
    %v127 = vpack.c.bf16 %v125, %v125
    %v128 = vld [vmem:[%s4] sm:$0xf]
    %v129 = vld [vmem:[%s4 + $0x4] sm:$0xf]
    %v130 = vld [vmem:[%s4 + $0x8] sm:$0xf]
    %v131 = vld [vmem:[%s4 + $0xc] sm:$0xf]
    %v132 = vld [vmem:[%s4 + $0x10] sm:$0xf]
    %v133 = vld [vmem:[%s4 + $0x14] sm:$0xf]
    %v134 = vld [vmem:[%s4 + $0x18] sm:$0xf]
    %v135 = vld [vmem:[%s4 + $0x1c] sm:$0xf]
    %v136 = vld [vmem:[%s4 + $0x20] sm:$0xf]
    %v137 = vld [vmem:[%s4 + $0x24] sm:$0xf]
    %v138 = vld [vmem:[%s4 + $0x28] sm:$0xf]
    %v139 = vld [vmem:[%s4 + $0x2c] sm:$0xf]
    %v140 = vld [vmem:[%s4 + $0x30] sm:$0xf]
    %v141 = vld [vmem:[%s4 + $0x34] sm:$0xf]
    %v142 = vld [vmem:[%s4 + $0x38] sm:$0xf]
    %v143 = vld [vmem:[%s4 + $0x3c] sm:$0xf]
    %v144 = vld [vmem:[%s4 + $0x40] sm:$0xf]
    %v145 = vld [vmem:[%s4 + $0x44] sm:$0xf]
    %v146 = vld [vmem:[%s4 + $0x48] sm:$0xf]
    %v147 = vld [vmem:[%s4 + $0x4c] sm:$0xf]
    %v148 = vld [vmem:[%s4 + $0x50] sm:$0xf]
    %v149 = vld [vmem:[%s4 + $0x54] sm:$0xf]
    %v150 = vld [vmem:[%s4 + $0x58] sm:$0xf]
    %v151 = vld [vmem:[%s4 + $0x5c] sm:$0xf]
    %v152 = vld [vmem:[%s4 + $0x60] sm:$0xf]
    %v153 = vld [vmem:[%s4 + $0x64] sm:$0xf]
    %v154 = vld [vmem:[%s4 + $0x68] sm:$0xf]
    %v155 = vld [vmem:[%s4 + $0x6c] sm:$0xf]
    %v156 = vld [vmem:[%s4 + $0x70] sm:$0xf]
    %v157 = vld [vmem:[%s4 + $0x74] sm:$0xf]
    %v158 = vld [vmem:[%s4 + $0x78] sm:$0xf]
    %v159 = vld [vmem:[%s4 + $0x7c] sm:$0xf]
    %v160 = vld [vmem:[%s5] sm:$0x1]
    %v162 = vlaneseq
    %v163 = vshrl.u32 %v162, 7
    %v164 = vsub.s32 0, %v163
    %v165 = vrot.slane %v160, %v164
    %v199 = vunpack.c.l.b16 %v128
    %v200 = vunpack.c.l.b16 %v129
    %v201 = vunpack.c.l.b16 %v130
    %v202 = vunpack.c.l.b16 %v131
    %v203 = vunpack.c.l.b16 %v132
    %v204 = vunpack.c.l.b16 %v133
    %v205 = vunpack.c.l.b16 %v134
    %v206 = vunpack.c.l.b16 %v135
    %v207 = vunpack.c.l.b16 %v136
    %v208 = vunpack.c.l.b16 %v137
    %v209 = vunpack.c.l.b16 %v138
    %v210 = vunpack.c.l.b16 %v139
    %v211 = vunpack.c.l.b16 %v140
    %v212 = vunpack.c.l.b16 %v141
    %v213 = vunpack.c.l.b16 %v142
    %v214 = vunpack.c.l.b16 %v143
    %v215 = vunpack.c.l.b16 %v144
    %v216 = vunpack.c.l.b16 %v145
    %v217 = vunpack.c.l.b16 %v146
    %v218 = vunpack.c.l.b16 %v147
    %v219 = vunpack.c.l.b16 %v148
    %v220 = vunpack.c.l.b16 %v149
    %v221 = vunpack.c.l.b16 %v150
    %v222 = vunpack.c.l.b16 %v151
    %v223 = vunpack.c.l.b16 %v152
    %v224 = vunpack.c.l.b16 %v153
    %v225 = vunpack.c.l.b16 %v154
    %v226 = vunpack.c.l.b16 %v155
    %v227 = vunpack.c.l.b16 %v156
    %v228 = vunpack.c.l.b16 %v157
    %v229 = vunpack.c.l.b16 %v158
    %v230 = vunpack.c.l.b16 %v159
    %v231 = vpack.c.b16 %v200, %v199
    %v232 = vpack.c.b16 %v202, %v201
    %v233 = vpack.c.b16 %v204, %v203
    %v234 = vpack.c.b16 %v206, %v205
    %v235 = vpack.c.b16 %v208, %v207
    %v236 = vpack.c.b16 %v210, %v209
    %v237 = vpack.c.b16 %v212, %v211
    %v238 = vpack.c.b16 %v214, %v213
    %v239 = vpack.c.b16 %v216, %v215
    %v240 = vpack.c.b16 %v218, %v217
    %v241 = vpack.c.b16 %v220, %v219
    %v242 = vpack.c.b16 %v222, %v221
    %v243 = vpack.c.b16 %v224, %v223
    %v244 = vpack.c.b16 %v226, %v225
    %v245 = vpack.c.b16 %v228, %v227
    %v246 = vpack.c.b16 %v230, %v229
    %263 = vmatprep.subr.bf16.mxu0 0
    %264 = vmatpush1.bf16.msra.mxu0 %v231
    %265 = vmatprep.subr.bf16.mxu0 0
    %266 = vmatpush1.bf16.msra.mxu0 %v232
    %267 = vmatprep.subr.bf16.mxu0 0
    %268 = vmatpush1.bf16.msra.mxu0 %v233
    %269 = vmatprep.subr.bf16.mxu0 0
    %270 = vmatpush1.bf16.msra.mxu0 %v234
    %271 = vmatprep.subr.bf16.mxu0 0
    %272 = vmatpush1.bf16.msra.mxu0 %v235
    %273 = vmatprep.subr.bf16.mxu0 0
    %274 = vmatpush1.bf16.msra.mxu0 %v236
    %275 = vmatprep.subr.bf16.mxu0 0
    %276 = vmatpush1.bf16.msra.mxu0 %v237
    %277 = vmatprep.subr.bf16.mxu0 0
    %278 = vmatpush1.bf16.msra.mxu0 %v238
    %279 = vmatprep.subr.bf16.mxu0 0
    %280 = vmatpush1.bf16.msra.mxu0 %v239
    %281 = vmatprep.subr.bf16.mxu0 0
    %282 = vmatpush1.bf16.msra.mxu0 %v240
    %283 = vmatprep.subr.bf16.mxu0 0
    %284 = vmatpush1.bf16.msra.mxu0 %v241
    %285 = vmatprep.subr.bf16.mxu0 0
    %286 = vmatpush1.bf16.msra.mxu0 %v242
    %287 = vmatprep.subr.bf16.mxu0 0
    %288 = vmatpush1.bf16.msra.mxu0 %v243
    %289 = vmatprep.subr.bf16.mxu0 0
    %290 = vmatpush1.bf16.msra.mxu0 %v244
    %291 = vmatprep.subr.bf16.mxu0 0
    %292 = vmatpush1.bf16.msra.mxu0 %v245
    %293 = vmatprep.subr.bf16.mxu0 0
    %294 = vmatpush1.bf16.msra.mxu0 %v246
    %295 = vmatprep.mubr.bf16.mxu0 %v127
    %296 = vmatmul.mubr.bf16.gmra.mrb[0].mxu0 %v126
    %v297 = vpop.f32.mrb[0].mxu0
    %v298 = vadd.f32 %v165, %v297
    %v299 = vpop.f32.mrb[0].mxu0
    %v300 = vpop.f32.mrb[0].mxu0
    %v301 = vpop.f32.mrb[0].mxu0
    %302 = vdwg.mxu0
    %v303 = vmax.f32 %v298, 0.0
    %v304 = vld [vmem:[%s6] sm:$0x1]
    %v305 = vpack.c.bf16 %v303, %v303
    %v306 = vld [vmem:[#allocation2] sm:$0x1]
    %308 = vset.pattern.permute.xlu0 0
    %309 = vperm.xlu0 %308, %v306
    %v310 = vpop.permute.xlu0 %309
    %v312 = vlaneseq
    %v313 = vshrl.u32 %v312, 7
    %v314 = vsub.s32 0, %v313
    %v315 = vrot.slane %v310, %v314
    %316 = vmatprep.subr.bf16.mxu0 0
    %317 = vmatpush1.bf16.xpose.msra.mxu0 %v305
    %318 = vmatprep.subr.bf16.mxu0 0
    %319 = vmatpush1.bf16.xpose.msra.mxu0 0
    %320 = vmatprep.subr.bf16.mxu0 0
    %321 = vmatpush1.bf16.xpose.msra.mxu0 0
    %322 = vmatprep.subr.bf16.mxu0 0
    %323 = vmatpush1.bf16.xpose.msra.mxu0 0
    %324 = vmatprep.subr.bf16.mxu0 0
    %325 = vmatpush1.bf16.xpose.msra.mxu0 0
    %326 = vmatprep.subr.bf16.mxu0 0
    %327 = vmatpush1.bf16.xpose.msra.mxu0 0
    %328 = vmatprep.subr.bf16.mxu0 0
    %329 = vmatpush1.bf16.xpose.msra.mxu0 0
    %330 = vmatprep.subr.bf16.mxu0 0
    %331 = vmatpush1.bf16.xpose.msra.mxu0 0
    %332 = vmatprep.subr.bf16.mxu0 0
    %333 = vmatpush1.bf16.xpose.msra.mxu0 0
    %334 = vmatprep.subr.bf16.mxu0 0
    %335 = vmatpush1.bf16.xpose.msra.mxu0 0
    %336 = vmatprep.subr.bf16.mxu0 0
    %337 = vmatpush1.bf16.xpose.msra.mxu0 0
    %338 = vmatprep.subr.bf16.mxu0 0
    %339 = vmatpush1.bf16.xpose.msra.mxu0 0
    %340 = vmatprep.subr.bf16.mxu0 0
    %341 = vmatpush1.bf16.xpose.msra.mxu0 0
    %342 = vmatprep.subr.bf16.mxu0 0
    %343 = vmatpush1.bf16.xpose.msra.mxu0 0
    %344 = vmatprep.subr.bf16.mxu0 0
    %345 = vmatpush1.bf16.xpose.msra.mxu0 0
    %346 = vmatprep.subr.bf16.mxu0 0
    %347 = vmatpush1.bf16.xpose.msra.mxu0 0
    %348 = vmatprep.mubr.bf16.mxu0 0
    %349 = vmatmul.mubr.bf16.gmra.mrb[0].mxu0 %v304
    %v350 = vpop.f32.mrb[0].mxu0
    %v351 = vadd.f32 %v315, %v350
    %v352 = vpop.f32.mrb[0].mxu0
    %v353 = vpop.f32.mrb[0].mxu0
    %v354 = vpop.f32.mrb[0].mxu0
    %355 = vdwg.mxu0
    %v356 = vxor.u32 %v351, 2147483648
    %v357 = vmul.f32 %v356, 1.442695
    %v358 = vpow.pop %v357
    %v359 = vadd.f32 %v358, 1.0
    %v360 = vrcp.pop %v359
    %v361 = vmul.f32 1.0, %v360
    %vm362 = vcmask 57344
    %363 = vst.msk [vmem:[#allocation3] sm:$0x1] %vm362, %v361
    // Predicated region
    $region34: #{baseline_head_forward.1} parent=1 // pred_check
      _
    $region35: #{baseline_head_forward.1} parent=1 // pred_check_branch
      %365 = sbr.rel (0) target = $region37
    $region36: #{baseline_head_forward.1} parent=1 // pred_region
      %s367 = ssub.s32 16, 16
      %368 = vsyncadd [#allocation4], %s367
      %s370 = sshll.u32 [#allocation3], 4
      %s371 = int_to_ptr.vmem [resolvable:$true] %s370
      %373 = dma.vmem_to_hbm [thread:$0]  %s371, 16, %s8, [#allocation4]
    $region37: #{baseline_head_forward.1} parent=1 // pred_fallthru
      _
    // Predicated region
    $region38: #{baseline_head_forward.1} parent=1 // pred_check
      _
    $region39: #{baseline_head_forward.1} parent=1 // pred_check_branch
      %375 = sbr.rel (0) target = $region41
    $region40: #{baseline_head_forward.1} parent=1 // pred_region
      %376 = dma.done [#allocation4], 16
    $region41: #{baseline_head_forward.1} parent=1 // pred_fallthru
      _
    %377 = vsyncpa [#allocation4], 1

</llo_original>
